<compile_context>
chip_gen: v5e
topology: v5e:2x2
jax: 0.10.0
libtpu: 0.0.40
codegen_flags: <defaults>
</compile_context>

<pallas_src>
import numpy as np

import jax
import jax.numpy as jnp
from jax.experimental import pallas as pl
from jax.experimental.pallas import tpu as pltpu


# ---------------------------------------------------------------------------
# Host-side interpolation-matrix construction (exact PyTorch coordinate math).
# ---------------------------------------------------------------------------
def _interp_matrix(in_size, out_size, mode):
    """Returns a (out_size, in_size) float32 matrix M with out = M @ in."""
    mode = mode.lower()
    dst = np.arange(out_size, dtype=np.float64)
    m = np.zeros((out_size, in_size), dtype=np.float32)
    scale = in_size / out_size
    if mode == "nearest":
        src = np.minimum(np.floor(dst * scale), in_size - 1).astype(np.int64)
        m[np.arange(out_size), src] = 1.0
    elif mode in ("bilinear", "linear"):
        # align_corners=False: src = (dst + 0.5) * scale - 0.5, clamped at 0.
        src = (dst + 0.5) * scale - 0.5
        src = np.maximum(src, 0.0)
        i0 = np.minimum(np.floor(src).astype(np.int64), in_size - 1)
        i1 = np.minimum(i0 + 1, in_size - 1)
        frac = (src - i0).astype(np.float32)
        np.add.at(m, (np.arange(out_size), i0), 1.0 - frac)
        np.add.at(m, (np.arange(out_size), i1), frac)
    else:
        raise NotImplementedError(f"Interpolate mode '{mode}' not supported")
    return m


# ---------------------------------------------------------------------------
# Pallas kernel: one batch element, Cb channels per grid step.
# ---------------------------------------------------------------------------
def _interp_kernel(x_ref, wh_ref, wwt_ref, o_ref):
    # x_ref:   (Cb, Hin, Win)
    # wh_ref:  (Hout, Hin)   f32
    # wwt_ref: (Win, Wout)   f32
    # o_ref:   (Cb, Hout, Wout)
    wh = wh_ref[...]
    wwt = wwt_ref[...]
    cb = x_ref.shape[0]
    for c in range(cb):  # static, small unrolled loop (cb <= 8)
        xc = x_ref[c].astype(jnp.float32)                           # (Hin, Win)
        th = jnp.dot(wh, xc, preferred_element_type=jnp.float32)    # (Hout, Win)
        oc = jnp.dot(th, wwt, preferred_element_type=jnp.float32)   # (Hout, Wout)
        o_ref[c] = oc.astype(o_ref.dtype)


def interpolate(x, size, mode="bilinear"):
    """Pallas equivalent of F.interpolate(x, size, mode, align_corners=False)."""
    N, C, Hin, Win = x.shape
    if isinstance(size, int):
        size = (size, size)
    Hout, Wout = size

    wh = jnp.asarray(_interp_matrix(Hin, Hout, mode))           # (Hout, Hin)
    wwt = jnp.asarray(_interp_matrix(Win, Wout, mode).T)        # (Win, Wout)

    itemsize = x.dtype.itemsize
    # Channel block: largest divisor of C (<= 8) whose in+out block stays small.
    budget = 2 << 20
    cb = 1
    for cand in range(1, min(C, 8) + 1):
        if C % cand == 0 and cand * (Hin * Win + Hout * Wout) * itemsize <= budget:
            cb = cand

    grid = (N, C // cb)

    # Explicit scoped-VMEM limit: double-buffered x/out blocks + weights + headroom.
    x_blk = cb * Hin * Win * itemsize
    o_blk = cb * Hout * Wout * itemsize
    w_bytes = (Hout * Hin + Win * Wout) * 4
    vmem_limit = 2 * (x_blk + o_blk) + 2 * w_bytes + (8 << 20)
    vmem_limit = int(min(max(vmem_limit, 16 << 20), 64 << 20))

    out = pl.pallas_call(
        _interp_kernel,
        out_shape=jax.ShapeDtypeStruct((N, C, Hout, Wout), x.dtype),
        grid_spec=pltpu.PrefetchScalarGridSpec(
            num_scalar_prefetch=0,
            grid=grid,
            in_specs=[
                pl.BlockSpec((None, cb, Hin, Win), lambda n, c: (n, c, 0, 0)),
                pl.BlockSpec((Hout, Hin), lambda n, c: (0, 0)),
                pl.BlockSpec((Win, Wout), lambda n, c: (0, 0)),
            ],
            out_specs=pl.BlockSpec((None, cb, Hout, Wout),
                                   lambda n, c: (n, c, 0, 0)),
        ),
        compiler_params=pltpu.CompilerParams(
            dimension_semantics=("parallel", "parallel"),
            vmem_limit_bytes=vmem_limit,
        ),
    )(x, wh, wwt)
    return out


# ---------------------------------------------------------------------------
# Independent pure-JAX reference (gather + lerp, same PyTorch coordinate math).
# ---------------------------------------------------------------------------
def interpolate_reference(x, size, mode="bilinear"):
    N, C, Hin, Win = x.shape
    if isinstance(size, int):
        size = (size, size)
    Hout, Wout = size
    mode = mode.lower()
    if mode == "nearest":
        hs = np.minimum(np.floor(np.arange(Hout) * (Hin / Hout)), Hin - 1).astype(np.int32)
        ws = np.minimum(np.floor(np.arange(Wout) * (Win / Wout)), Win - 1).astype(np.int32)
        return x[:, :, hs, :][:, :, :, ws]

    def coords(out_s, in_s):
        s = (np.arange(out_s, dtype=np.float64) + 0.5) * (in_s / out_s) - 0.5
        s = np.maximum(s, 0.0)
        i0 = np.minimum(np.floor(s).astype(np.int32), in_s - 1)
        i1 = np.minimum(i0 + 1, in_s - 1)
        f = (s - i0).astype(np.float32)
        return i0, i1, f

    h0, h1, fh = coords(Hout, Hin)
    w0, w1, fw = coords(Wout, Win)
    fh = jnp.asarray(fh)[None, None, :, None]
    fw = jnp.asarray(fw)[None, None, None, :]
    xh0 = x[:, :, h0, :]
    xh1 = x[:, :, h1, :]
    top = xh0[:, :, :, w0] * (1.0 - fw) + xh0[:, :, :, w1] * fw
    bot = xh1[:, :, :, w0] * (1.0 - fw) + xh1[:, :, :, w1] * fw
    return top * (1.0 - fh) + bot * fh


if __name__ == "__main__":
    key = jax.random.PRNGKey(0)
    N, C, H, W = 2, 4, 16, 16
    x = jax.random.normal(key, (N, C, H, W), jnp.float32)

    # Bilinear upsample (the typical use of this module).
    out = interpolate(x, size=(32, 32), mode="bilinear")
    out = jax.block_until_ready(out)
    ref = interpolate_reference(x, size=(32, 32), mode="bilinear")
    if out.shape != (N, C, 32, 32) or not jnp.allclose(out, ref, atol=1e-5, rtol=1e-5):
        raise AssertionError("Pallas bilinear upsample mismatch vs JAX reference")

    # Bilinear non-uniform downsample (exercises the clamped-weight path).
    out2 = interpolate(x, size=(10, 12), mode="bilinear")
    out2 = jax.block_until_ready(out2)
    ref2 = interpolate_reference(x, size=(10, 12), mode="bilinear")
    if out2.shape != (N, C, 10, 12) or not jnp.allclose(out2, ref2, atol=1e-5, rtol=1e-5):
        raise AssertionError("Pallas bilinear downsample mismatch vs JAX reference")

    print("KERNEL_OK")
</pallas_src>

<mosaic_0001>
module attributes {stable_mosaic.version = 11 : i64} {
  func.func @_interp_kernel(%arg0: i32, %arg1: i32, %arg2: memref<1x4x16x16xf32, #tpu.memory_space<vmem>>, %arg3: memref<32x16xf32, #tpu.memory_space<vmem>>, %arg4: memref<16x32xf32, #tpu.memory_space<vmem>>, %arg5: memref<1x4x32x32xf32, #tpu.memory_space<vmem>>) attributes {dimension_semantics = [#tpu.dimension_semantics<parallel>, #tpu.dimension_semantics<parallel>], iteration_bounds = array<i64: 2, 1>, scalar_prefetch = 0 : i64, scratch_operands = 0 : i64, tpu.core_type = #tpu.core_type<tc>, window_params = [{transform_indices = @transform_0, window_bounds = array<i64: 1, 4, 16, 16>}, {pipeline_mode = #tpu.pipeline_mode<synchronous>, transform_indices = @transform_1, window_bounds = array<i64: 32, 16>}, {pipeline_mode = #tpu.pipeline_mode<synchronous>, transform_indices = @transform_2, window_bounds = array<i64: 16, 32>}, {transform_indices = @transform_3, window_bounds = array<i64: 1, 4, 32, 32>}]} {
    %c0 = arith.constant 0 : index
    %c0_0 = arith.constant 0 : index
    %0 = vector.load %arg3[%c0, %c0_0] : memref<32x16xf32, #tpu.memory_space<vmem>>, vector<32x16xf32>
    %c0_1 = arith.constant 0 : index
    %c0_2 = arith.constant 0 : index
    %1 = vector.load %arg4[%c0_1, %c0_2] : memref<16x32xf32, #tpu.memory_space<vmem>>, vector<16x32xf32>
    %c0_3 = arith.constant 0 : index
    %c0_4 = arith.constant 0 : index
    %c0_5 = arith.constant 0 : index
    %c0_6 = arith.constant 0 : index
    %2 = vector.load %arg2[%c0_3, %c0_4, %c0_5, %c0_6] : memref<1x4x16x16xf32, #tpu.memory_space<vmem>>, vector<1x1x16x16xf32>
    %3 = vector.shape_cast %2 : vector<1x1x16x16xf32> to vector<16x16xf32>
    %cst = arith.constant dense<0.000000e+00> : vector<32x16xf32>
    %4 = tpu.matmul %0, %3, %cst {dimension_numbers = #tpu.dot_dimension_numbers<[1], [0], [0], [1], [0, 0, 1, 1], [], []>} : vector<32x16xf32>, vector<16x16xf32>, vector<32x16xf32> -> vector<32x16xf32>
    %cst_7 = arith.constant dense<0.000000e+00> : vector<32x32xf32>
    %5 = tpu.matmul %4, %1, %cst_7 {dimension_numbers = #tpu.dot_dimension_numbers<[1], [0], [0], [1], [0, 0, 1, 1], [], []>} : vector<32x16xf32>, vector<16x32xf32>, vector<32x32xf32> -> vector<32x32xf32>
    %c0_8 = arith.constant 0 : index
    %c0_9 = arith.constant 0 : index
    %c0_10 = arith.constant 0 : index
    %c0_11 = arith.constant 0 : index
    %6 = vector.load %arg5[%c0_8, %c0_9, %c0_10, %c0_11] : memref<1x4x32x32xf32, #tpu.memory_space<vmem>>, vector<1x1x32x32xf32>
    %7 = vector.shape_cast %6 : vector<1x1x32x32xf32> to vector<32x32xf32>
    %8 = vector.shape_cast %5 : vector<32x32xf32> to vector<1x1x32x32xf32>
    tpu.vector_store %arg5[%c0_8, %c0_9, %c0_10, %c0_11], %8 {strides = array<i32>} : memref<1x4x32x32xf32, #tpu.memory_space<vmem>>, vector<1x1x32x32xf32>,
    %c0_12 = arith.constant 0 : index
    %c1 = arith.constant 1 : index
    %c0_13 = arith.constant 0 : index
    %c0_14 = arith.constant 0 : index
    %9 = vector.load %arg2[%c0_12, %c1, %c0_13, %c0_14] : memref<1x4x16x16xf32, #tpu.memory_space<vmem>>, vector<1x1x16x16xf32>
    %10 = vector.shape_cast %9 : vector<1x1x16x16xf32> to vector<16x16xf32>
    %cst_15 = arith.constant dense<0.000000e+00> : vector<32x16xf32>
    %11 = tpu.matmul %0, %10, %cst_15 {dimension_numbers = #tpu.dot_dimension_numbers<[1], [0], [0], [1], [0, 0, 1, 1], [], []>} : vector<32x16xf32>, vector<16x16xf32>, vector<32x16xf32> -> vector<32x16xf32>
    %cst_16 = arith.constant dense<0.000000e+00> : vector<32x32xf32>
    %12 = tpu.matmul %11, %1, %cst_16 {dimension_numbers = #tpu.dot_dimension_numbers<[1], [0], [0], [1], [0, 0, 1, 1], [], []>} : vector<32x16xf32>, vector<16x32xf32>, vector<32x32xf32> -> vector<32x32xf32>
    %c0_17 = arith.constant 0 : index
    %c1_18 = arith.constant 1 : index
    %c0_19 = arith.constant 0 : index
    %c0_20 = arith.constant 0 : index
    %13 = vector.load %arg5[%c0_17, %c1_18, %c0_19, %c0_20] : memref<1x4x32x32xf32, #tpu.memory_space<vmem>>, vector<1x1x32x32xf32>
    %14 = vector.shape_cast %13 : vector<1x1x32x32xf32> to vector<32x32xf32>
    %15 = vector.shape_cast %12 : vector<32x32xf32> to vector<1x1x32x32xf32>
    tpu.vector_store %arg5[%c0_17, %c1_18, %c0_19, %c0_20], %15 {strides = array<i32>} : memref<1x4x32x32xf32, #tpu.memory_space<vmem>>, vector<1x1x32x32xf32>,
    %c0_21 = arith.constant 0 : index
    %c2 = arith.constant 2 : index
    %c0_22 = arith.constant 0 : index
    %c0_23 = arith.constant 0 : index
    %16 = vector.load %arg2[%c0_21, %c2, %c0_22, %c0_23] : memref<1x4x16x16xf32, #tpu.memory_space<vmem>>, vector<1x1x16x16xf32>
    %17 = vector.shape_cast %16 : vector<1x1x16x16xf32> to vector<16x16xf32>
    %cst_24 = arith.constant dense<0.000000e+00> : vector<32x16xf32>
    %18 = tpu.matmul %0, %17, %cst_24 {dimension_numbers = #tpu.dot_dimension_numbers<[1], [0], [0], [1], [0, 0, 1, 1], [], []>} : vector<32x16xf32>, vector<16x16xf32>, vector<32x16xf32> -> vector<32x16xf32>
    %cst_25 = arith.constant dense<0.000000e+00> : vector<32x32xf32>
    %19 = tpu.matmul %18, %1, %cst_25 {dimension_numbers = #tpu.dot_dimension_numbers<[1], [0], [0], [1], [0, 0, 1, 1], [], []>} : vector<32x16xf32>, vector<16x32xf32>, vector<32x32xf32> -> vector<32x32xf32>
    %c0_26 = arith.constant 0 : index
    %c2_27 = arith.constant 2 : index
    %c0_28 = arith.constant 0 : index
    %c0_29 = arith.constant 0 : index
    %20 = vector.load %arg5[%c0_26, %c2_27, %c0_28, %c0_29] : memref<1x4x32x32xf32, #tpu.memory_space<vmem>>, vector<1x1x32x32xf32>
    %21 = vector.shape_cast %20 : vector<1x1x32x32xf32> to vector<32x32xf32>
    %22 = vector.shape_cast %19 : vector<32x32xf32> to vector<1x1x32x32xf32>
    tpu.vector_store %arg5[%c0_26, %c2_27, %c0_28, %c0_29], %22 {strides = array<i32>} : memref<1x4x32x32xf32, #tpu.memory_space<vmem>>, vector<1x1x32x32xf32>,
    %c0_30 = arith.constant 0 : index
    %c3 = arith.constant 3 : index
    %c0_31 = arith.constant 0 : index
    %c0_32 = arith.constant 0 : index
    %23 = vector.load %arg2[%c0_30, %c3, %c0_31, %c0_32] : memref<1x4x16x16xf32, #tpu.memory_space<vmem>>, vector<1x1x16x16xf32>
    %24 = vector.shape_cast %23 : vector<1x1x16x16xf32> to vector<16x16xf32>
    %cst_33 = arith.constant dense<0.000000e+00> : vector<32x16xf32>
    %25 = tpu.matmul %0, %24, %cst_33 {dimension_numbers = #tpu.dot_dimension_numbers<[1], [0], [0], [1], [0, 0, 1, 1], [], []>} : vector<32x16xf32>, vector<16x16xf32>, vector<32x16xf32> -> vector<32x16xf32>
    %cst_34 = arith.constant dense<0.000000e+00> : vector<32x32xf32>
    %26 = tpu.matmul %25, %1, %cst_34 {dimension_numbers = #tpu.dot_dimension_numbers<[1], [0], [0], [1], [0, 0, 1, 1], [], []>} : vector<32x16xf32>, vector<16x32xf32>, vector<32x32xf32> -> vector<32x32xf32>
    %c0_35 = arith.constant 0 : index
    %c3_36 = arith.constant 3 : index
    %c0_37 = arith.constant 0 : index
    %c0_38 = arith.constant 0 : index
    %27 = vector.load %arg5[%c0_35, %c3_36, %c0_37, %c0_38] : memref<1x4x32x32xf32, #tpu.memory_space<vmem>>, vector<1x1x32x32xf32>
    %28 = vector.shape_cast %27 : vector<1x1x32x32xf32> to vector<32x32xf32>
    %29 = vector.shape_cast %26 : vector<32x32xf32> to vector<1x1x32x32xf32>
    tpu.vector_store %arg5[%c0_35, %c3_36, %c0_37, %c0_38], %29 {strides = array<i32>} : memref<1x4x32x32xf32, #tpu.memory_space<vmem>>, vector<1x1x32x32xf32>,
    return
  }
  func.func @transform_0(%arg0: i32, %arg1: i32) -> (i32, i32, i32, i32) {
    %c0_i32 = arith.constant 0 : i32
    %c0_i32_0 = arith.constant 0 : i32
    %c0_i32_1 = arith.constant 0 : i32
    return %arg0, %arg1, %c0_i32, %c0_i32_0 : i32, i32, i32, i32
  }
  func.func @transform_1(%arg0: i32, %arg1: i32) -> (i32, i32) {
    %c0_i32 = arith.constant 0 : i32
    %c0_i32_0 = arith.constant 0 : i32
    %c0_i32_1 = arith.constant 0 : i32
    return %c0_i32, %c0_i32_0 : i32, i32
  }
  func.func @transform_2(%arg0: i32, %arg1: i32) -> (i32, i32) {
    %c0_i32 = arith.constant 0 : i32
    %c0_i32_0 = arith.constant 0 : i32
    %c0_i32_1 = arith.constant 0 : i32
    return %c0_i32, %c0_i32_0 : i32, i32
  }
  func.func @transform_3(%arg0: i32, %arg1: i32) -> (i32, i32, i32, i32) {
    %c0_i32 = arith.constant 0 : i32
    %c0_i32_0 = arith.constant 0 : i32
    %c0_i32_1 = arith.constant 0 : i32
    return %arg0, %arg1, %c0_i32, %c0_i32_0 : i32, i32, i32, i32
  }
}

</mosaic_0001>

<llo_original>
// kernel: tpu_custom_call.1
$region0: #{tpu_custom_call.1}
  #allocation0 [shape = 'u32[]', space=smem, size = 0x4, offset = 0x4, fixed_abs, tag = 'smem constant byte address 0x4 - core index']
  #allocation1 [shape = 'u32[72,128]{1,0:T(1,128)}', space=vmem, size = 0x9000, scoped, tag = 'internal scratch']
  %s0 = inlined_call_operand.hbm [shape: f32[2,4,16,16], index: 0, kind: input, shape index: {}]
  %s1 = inlined_call_operand.vmem [shape: f32[32,16], index: 1, kind: input, shape index: {}]
  %s2 = inlined_call_operand.vmem [shape: f32[16,32], index: 2, kind: input, shape index: {}]
  %s3 = inlined_call_operand.hbm [shape: f32[2,4,32,32], index: 3, kind: output, shape index: {}]
  %s4 = sld [smem:[#allocation0]]
  $region49: #{tpu_custom_call.1} parent=0
    _
  %s6 = ssub.s32 1, %s4
  %s7 = scalar_select 0, %s6, %s4
  $region1: #{tpu_custom_call.1} parent=0
    #allocation2 [shape = 'u8[65536]{0}', space=vmem, size = 0x10000, scoped, tag = 'input window, operand 0']
    #allocation3 [shape = 's32[2]{0}', space=sflag, size = 0x8, scoped, tag = 'scoped memory for tpu_custom_call.1']
    #allocation4 [shape = 's32[2]{0}', space=sflag, size = 0x8, scoped, tag = 'scoped memory for tpu_custom_call.1']
    #allocation5 [shape = 'u8[131072]{0}', space=vmem, size = 0x20000, scoped, tag = 'output window, operand 0']
    %8 = vsyncpa [#allocation3], 0
    %s9 = scalar_lea.sflag [#allocation3], 1
    %10 = vsyncpa %s9, 0
    %11 = vsyncpa [#allocation4], 0
    %s12 = scalar_lea.sflag [#allocation4], 1
    %13 = vsyncpa %s12, 0
    loop: start=0, step=1, limit=4
    $region2: #{tpu_custom_call.1} parent=1 // loop_pre_header
      _
    $region3: #{tpu_custom_call.1} parent=1 // loop_header
      %s15 = sphi 0, %s19
      %p16 = scmp.ge.s32.totalorder %s15, 4
      %s22 = sphi 0, %s34
      %s23 = sphi 0, %s30
      %s24 = sphi 0, %s22
      %s25 = sphi 0, %s23
      %s26 = sphi 0, %s24
      %s27 = sphi 0, %s25
      %s39 = sphi 0, %s41
      %s42 = sphi 0, %s39
      %s43 = sphi 0, %s42
      %s59 = sphi 0, %s43
      %s63 = sphi 0, %s63
      %s65 = sphi 0, %s63
      %s66 = sphi 0, %s65
      %s80 = sphi 0, %s66
      %s84 = sphi 0, %s84
      %s86 = sphi 0, %s84
      %s87 = sphi 0, %s86
      %s101 = sphi 0, %s87
      %s109 = sphi 0, %s111
      %s112 = sphi 0, %s109
      %s113 = sphi 0, %s112
      %s129 = sphi 0, %s113
    $region4: #{tpu_custom_call.1} parent=1 // loop_header_branch
      %18 = sbr.rel (%p16) target = $region8
    $region5: #{tpu_custom_call.1} parent=1 // loop_body
      %s20 = ssub.s32 %s15, 1
      %s21 = ssub.s32 %s15, 2
      %s28 = sadd.s32 1, %s23
      %p29 = scmp.ge.s32.totalorder %s28, 1
      %s30 = scalar_select %p29, 0, %s28
      %s31 = sadd.s32 1, %s22
      %s32 = scalar_select %p29, %s31, %s22
      %p33 = scmp.ge.s32.totalorder %s32, 2
      %s34 = scalar_select %p33, 0, %s32
      %s35 = ssub.s32 %s22, %s34
      %s36 = ssub.s32 %s23, %s30
      %s37 = sor.u32 %s35, %s36
      %p38 = scmp.eq.s32.totalorder %s37, 0
      %s40 = sadd.s32 %s39, 1
      %s41 = scalar_select %p38, %s39, %s40
      %p44 = pneg %p38
      %p45 = scmp.eq.s32.totalorder %s15, 1
      %p46 = por %p44, %p45
      %p47 = scmp.ne.s32.totalorder %s39, %s42
      %p48 = scmp.eq.s32.totalorder %s15, 0
      %p49 = por %p47, %p48
      %p50 = scmp.ne.s32.totalorder %s39, %s42
      %p51 = scmp.eq.s32.totalorder %s20, 1
      %p52 = por %p50, %p51
      %p53 = scmp.ne.s32.totalorder %s42, %s43
      %p54 = scmp.eq.s32.totalorder %s20, 0
      %p55 = por %p53, %p54
      %p56 = scmp.ne.s32.totalorder %s42, %s43
      %p57 = scmp.eq.s32.totalorder %s21, 1
      %p58 = por %p56, %p57
      %p60 = scmp.ne.s32.totalorder %s43, %s59
      %p61 = scmp.eq.s32.totalorder %s21, 0
      %p62 = por %p60, %p61
      %s64 = sadd.s32 %s63, 1
      %p67 = scmp.eq.s32.totalorder %s15, 1
      %p68 = scmp.ne.s32.totalorder %s63, %s65
      %p69 = scmp.eq.s32.totalorder %s15, 0
      %p70 = por %p68, %p69
      %p71 = scmp.ne.s32.totalorder %s63, %s65
      %p72 = scmp.eq.s32.totalorder %s20, 1
      %p73 = por %p71, %p72
      %p74 = scmp.ne.s32.totalorder %s65, %s66
      %p75 = scmp.eq.s32.totalorder %s20, 0
      %p76 = por %p74, %p75
      %p77 = scmp.ne.s32.totalorder %s65, %s66
      %p78 = scmp.eq.s32.totalorder %s21, 1
      %p79 = por %p77, %p78
      %p81 = scmp.ne.s32.totalorder %s66, %s80
      %p82 = scmp.eq.s32.totalorder %s21, 0
      %p83 = por %p81, %p82
      %s85 = sadd.s32 %s84, 1
      %p88 = scmp.eq.s32.totalorder %s15, 1
      %p89 = scmp.ne.s32.totalorder %s84, %s86
      %p90 = scmp.eq.s32.totalorder %s15, 0
      %p91 = por %p89, %p90
      %p92 = scmp.ne.s32.totalorder %s84, %s86
      %p93 = scmp.eq.s32.totalorder %s20, 1
      %p94 = por %p92, %p93
      %p95 = scmp.ne.s32.totalorder %s86, %s87
      %p96 = scmp.eq.s32.totalorder %s20, 0
      %p97 = por %p95, %p96
      %p98 = scmp.ne.s32.totalorder %s86, %s87
      %p99 = scmp.eq.s32.totalorder %s21, 1
      %p100 = por %p98, %p99
      %p102 = scmp.ne.s32.totalorder %s87, %s101
      %p103 = scmp.eq.s32.totalorder %s21, 0
      %p104 = por %p102, %p103
      %s105 = ssub.s32 %s22, %s34
      %s106 = ssub.s32 %s23, %s30
      %s107 = sor.u32 %s105, %s106
      %p108 = scmp.eq.s32.totalorder %s107, 0
      %s110 = sadd.s32 %s109, 1
      %s111 = scalar_select %p108, %s109, %s110
      %p114 = pneg %p108
      %p115 = scmp.eq.s32.totalorder %s15, 1
      %p116 = por %p114, %p115
      %p117 = scmp.ne.s32.totalorder %s109, %s112
      %p118 = scmp.eq.s32.totalorder %s15, 0
      %p119 = por %p117, %p118
      %p120 = scmp.ne.s32.totalorder %s109, %s112
      %p121 = scmp.eq.s32.totalorder %s20, 1
      %p122 = por %p120, %p121
      %p123 = scmp.ne.s32.totalorder %s112, %s113
      %p124 = scmp.eq.s32.totalorder %s20, 0
      %p125 = por %p123, %p124
      %p126 = scmp.ne.s32.totalorder %s112, %s113
      %p127 = scmp.eq.s32.totalorder %s21, 1
      %p128 = por %p126, %p127
      %p130 = scmp.ne.s32.totalorder %s113, %s129
      %p131 = scmp.eq.s32.totalorder %s21, 0
      %p132 = por %p130, %p131
      %p133 = scmp.le.s32.totalorder 1, %s15
      %p134 = scmp.lt.s32.totalorder %s15, 3
      %p135 = pnand %p133, %p134
      %p136 = pneg %p135
      // Predicated region
      $region9: #{tpu_custom_call.1} parent=5 // pred_check
        _
      $region10: #{tpu_custom_call.1} parent=5 // pred_check_branch
        %138 = sbr.rel (%p135) target = $region12
      $region11: #{tpu_custom_call.1} parent=5 // pred_region
        %s139 = ssub.s32 %s15, 1
        // Predicated region
        $region13: #{tpu_custom_call.1} parent=11 // pred_check
          %p140 = pneg %p76
        $region14: #{tpu_custom_call.1} parent=11 // pred_check_branch
          %142 = sbr.rel (%p140) target = $region16
        $region15: #{tpu_custom_call.1} parent=11 // pred_region
          _
        $region16: #{tpu_custom_call.1} parent=11 // pred_fallthru
          _
        // Predicated region
        $region17: #{tpu_custom_call.1} parent=11 // pred_check
          %p143 = pneg %p97
        $region18: #{tpu_custom_call.1} parent=11 // pred_check_branch
          %145 = sbr.rel (%p143) target = $region20
        $region19: #{tpu_custom_call.1} parent=11 // pred_region
          _
        $region20: #{tpu_custom_call.1} parent=11 // pred_fallthru
          _
      $region12: #{tpu_custom_call.1} parent=5 // pred_fallthru
        _
      %p146 = scmp.lt.s32.totalorder %s15, 2
      // Predicated region
      $region21: #{tpu_custom_call.1} parent=5 // pred_check
        %p147 = pneg %p146
      $region22: #{tpu_custom_call.1} parent=5 // pred_check_branch
        %149 = sbr.rel (%p147) target = $region24
      $region23: #{tpu_custom_call.1} parent=5 // pred_region
        // Predicated region
        $region25: #{tpu_custom_call.1} parent=23 // pred_check
          %p150 = pneg %p49
        $region26: #{tpu_custom_call.1} parent=23 // pred_check_branch
          %152 = sbr.rel (%p150) target = $region28
        $region27: #{tpu_custom_call.1} parent=23 // pred_region
          %s153 = sand.u32 %s39, 1
          %s154 = scalar_lea.sflag [#allocation3], %s153
          %s155 = sand.u32 %s39, 1
          %s156 = smul.addr %s155, 64
          %s157 = scalar_lea.vmem [#allocation2], %s156
          %s158 = smul.u32 4, %s23
          %160 = vsyncadd %s154, 0
          %s161 = smul.addr %s158, 2
          %s162 = smul.addr %s22, 8
          %s163 = sadd.s32 %s161, %s162
          %s164 = smul.addr %s163, 8
          %s165 = scalar_lea.hbm %s0, %s164
          %s166 = sshll.u32 %s165, 4
          %s167 = int_to_ptr.hbm [resolvable:$true] %s166
          %s168 = sshll.u32 %s157, 4
          %s169 = int_to_ptr.vmem [resolvable:$true] %s168
          %174 = dma.hbm_to_vmem [thread:$0]  %s167, 1024, %s169, %s154, 128, 128, 8
        $region28: #{tpu_custom_call.1} parent=23 // pred_fallthru
          _
      $region24: #{tpu_custom_call.1} parent=5 // pred_fallthru
        _
      %p175 = scmp.le.s32.totalorder 1, %s15
      %p176 = scmp.lt.s32.totalorder %s15, 3
      %p177 = pnand %p175, %p176
      %p178 = pneg %p177
      // Predicated region
      $region29: #{tpu_custom_call.1} parent=5 // pred_check
        _
      $region30: #{tpu_custom_call.1} parent=5 // pred_check_branch
        %180 = sbr.rel (%p177) target = $region32
      $region31: #{tpu_custom_call.1} parent=5 // pred_region
        %s181 = ssub.s32 %s15, 1
        %s182 = sand.u32 %s42, 1
        %s183 = scalar_lea.sflag [#allocation3], %s182
        %s184 = sand.u32 %s42, 1
        %s185 = smul.addr %s184, 64
        %s186 = scalar_lea.vmem [#allocation2], %s185
        // Predicated region
        $region33: #{tpu_custom_call.1} parent=31 // pred_check
          %p187 = pneg %p55
        $region34: #{tpu_custom_call.1} parent=31 // pred_check_branch
          %189 = sbr.rel (%p187) target = $region36
        $region35: #{tpu_custom_call.1} parent=31 // pred_region
          %191 = dma.done %s183, 1024
        $region36: #{tpu_custom_call.1} parent=31 // pred_fallthru
          _
        %s192 = sand.u32 %s42, 1
        %s193 = scalar_lea.sflag [#allocation3], %s192
        %s194 = sand.u32 %s42, 1
        %s195 = smul.addr %s194, 64
        %s196 = scalar_lea.vmem [#allocation2], %s195
        %p197 = pneg %p55
        %p198 = pneg %p52
        %p199 = pneg %p76
        %p200 = pneg %p73
        %p201 = pneg %p97
        %p202 = pneg %p94
        %p203 = pneg %p125
        %p204 = pneg %p122
        %s205 = sand.u32 %s112, 1
        %s206 = scalar_lea.sflag [#allocation4], %s205
        %s207 = sand.u32 %s112, 1
        %s208 = smul.addr %s207, 128
        %s209 = scalar_lea.vmem [#allocation5], %s208
        %s210 = smul.u32 4, %s25
        %s211 = smul.u32 4, %s25
        %v212 = vld [vmem:[%s1] sm:$0xff]
        %v213 = vld [vmem:[%s1 + $0x8] sm:$0xff]
        %v214 = vld [vmem:[%s1 + $0x10] sm:$0xff]
        %v215 = vld [vmem:[%s1 + $0x18] sm:$0xff]
        %v216 = vld [vmem:[%s2] sm:$0xff]
        %v217 = vld [vmem:[%s2 + $0x8] sm:$0xff]
        %v218 = vld [vmem:[%s186] sm:$0xff]
        %v219 = vld [vmem:[%s186 + $0x8] sm:$0xff]
        %vm220 = vcmask 130048
        %v222 = vsel %vm220, %v212, 0
        %v225 = vsel %vm220, %v213, 0
        %v228 = vsel %vm220, %v214, 0
        %v231 = vsel %vm220, %v215, 0
        %233 = vmatpush.msra.mxu0 0.0
        %234 = vmatpush.msra.mxu0 0.0
        %235 = vmatpush.msra.mxu0 0.0
        %236 = vmatpush.msra.mxu0 0.0
        %237 = vmatpush.msra.mxu0 0.0
        %238 = vmatpush.msra.mxu0 0.0
        %239 = vmatpush.msra.mxu0 0.0
        %240 = vmatpush.msra.mxu0 0.0
        %241 = vmatpush.msra.mxu0 0.0
        %242 = vmatpush.msra.mxu0 0.0
        %243 = vmatpush.msra.mxu0 0.0
        %244 = vmatpush.msra.mxu0 0.0
        %245 = vmatpush.msra.mxu0 0.0
        %246 = vmatpush.msra.mxu0 0.0
        %247 = vmatpush.msra.mxu0 %v219
        %248 = vmatpush.msra.mxu0 %v218
        %249 = vmatmul.f32.gmra.mxu0 %v222
        %v250 = vpop.f32.mrf.mxu0
        %v251 = vadd.f32 0.0, %v250
        %252 = vmatmul.f32.gmra.mxu0 %v225
        %v253 = vpop.f32.mrf.mxu0
        %v254 = vadd.f32 0.0, %v253
        %255 = vmatmul.f32.gmra.mxu0 %v228
        %v256 = vpop.f32.mrf.mxu0
        %v257 = vadd.f32 0.0, %v256
        %258 = vmatmul.f32.gmra.mxu0 %v231
        %v259 = vpop.f32.mrf.mxu0
        %v260 = vadd.f32 0.0, %v259
        %261 = vdwg.mxu0
        %v263 = vsel %vm220, %v251, 0
        %v266 = vsel %vm220, %v254, 0
        %v269 = vsel %vm220, %v257, 0
        %v272 = vsel %vm220, %v260, 0
        %274 = vmatpush.msra.mxu0 0.0
        %275 = vmatpush.msra.mxu0 0.0
        %276 = vmatpush.msra.mxu0 0.0
        %277 = vmatpush.msra.mxu0 0.0
        %278 = vmatpush.msra.mxu0 0.0
        %279 = vmatpush.msra.mxu0 0.0
        %280 = vmatpush.msra.mxu0 0.0
        %281 = vmatpush.msra.mxu0 0.0
        %282 = vmatpush.msra.mxu0 0.0
        %283 = vmatpush.msra.mxu0 0.0
        %284 = vmatpush.msra.mxu0 0.0
        %285 = vmatpush.msra.mxu0 0.0
        %286 = vmatpush.msra.mxu0 0.0
        %287 = vmatpush.msra.mxu0 0.0
        %288 = vmatpush.msra.mxu0 %v217
        %289 = vmatpush.msra.mxu0 %v216
        %290 = vmatmul.f32.gmra.mxu0 %v263
        %v291 = vpop.f32.mrf.mxu0
        %v292 = vadd.f32 0.0, %v291
        %293 = vmatmul.f32.gmra.mxu0 %v266
        %v294 = vpop.f32.mrf.mxu0
        %v295 = vadd.f32 0.0, %v294
        %296 = vmatmul.f32.gmra.mxu0 %v269
        %v297 = vpop.f32.mrf.mxu0
        %v298 = vadd.f32 0.0, %v297
        %299 = vmatmul.f32.gmra.mxu0 %v272
        %v300 = vpop.f32.mrf.mxu0
        %v301 = vadd.f32 0.0, %v300
        %302 = vdwg.mxu0
        %vm303 = vcmask 261120
        %304 = vst.msk [vmem:[%s209] sm:$0xff] %vm303, %v292
        %305 = vst.msk [vmem:[%s209 + $0x8] sm:$0xff] %vm303, %v295
        %306 = vst.msk [vmem:[%s209 + $0x10] sm:$0xff] %vm303, %v298
        %307 = vst.msk [vmem:[%s209 + $0x18] sm:$0xff] %vm303, %v301
        %s308 = scalar_lea.vmem %s186, 16 [#allocation2]
        %v309 = vld [vmem:[%s308] sm:$0xff]
        %v310 = vld [vmem:[%s308 + $0x8] sm:$0xff]
        %311 = vmatpush.msra.mxu0 0.0
        %312 = vmatpush.msra.mxu0 0.0
        %313 = vmatpush.msra.mxu0 0.0
        %314 = vmatpush.msra.mxu0 0.0
        %315 = vmatpush.msra.mxu0 0.0
        %316 = vmatpush.msra.mxu0 0.0
        %317 = vmatpush.msra.mxu0 0.0
        %318 = vmatpush.msra.mxu0 0.0
        %319 = vmatpush.msra.mxu0 0.0
        %320 = vmatpush.msra.mxu0 0.0
        %321 = vmatpush.msra.mxu0 0.0
        %322 = vmatpush.msra.mxu0 0.0
        %323 = vmatpush.msra.mxu0 0.0
        %324 = vmatpush.msra.mxu0 0.0
        %325 = vmatpush.msra.mxu0 %v310
        %326 = vmatpush.msra.mxu0 %v309
        %327 = vmatmul.f32.gmra.mxu0 %v222
        %v328 = vpop.f32.mrf.mxu0
        %v329 = vadd.f32 0.0, %v328
        %330 = vmatmul.f32.gmra.mxu0 %v225
        %v331 = vpop.f32.mrf.mxu0
        %v332 = vadd.f32 0.0, %v331
        %333 = vmatmul.f32.gmra.mxu0 %v228
        %v334 = vpop.f32.mrf.mxu0
        %v335 = vadd.f32 0.0, %v334
        %336 = vmatmul.f32.gmra.mxu0 %v231
        %v337 = vpop.f32.mrf.mxu0
        %v338 = vadd.f32 0.0, %v337
        %339 = vdwg.mxu0
        %v341 = vsel %vm220, %v329, 0
        %v344 = vsel %vm220, %v332, 0
        %v347 = vsel %vm220, %v335, 0
        %v350 = vsel %vm220, %v338, 0
        %352 = vmatpush.msra.mxu0 0.0
        %353 = vmatpush.msra.mxu0 0.0
        %354 = vmatpush.msra.mxu0 0.0
        %355 = vmatpush.msra.mxu0 0.0
        %356 = vmatpush.msra.mxu0 0.0
        %357 = vmatpush.msra.mxu0 0.0
        %358 = vmatpush.msra.mxu0 0.0
        %359 = vmatpush.msra.mxu0 0.0
        %360 = vmatpush.msra.mxu0 0.0
        %361 = vmatpush.msra.mxu0 0.0
        %362 = vmatpush.msra.mxu0 0.0
        %363 = vmatpush.msra.mxu0 0.0
        %364 = vmatpush.msra.mxu0 0.0
        %365 = vmatpush.msra.mxu0 0.0
        %366 = vmatpush.msra.mxu0 %v217
        %367 = vmatpush.msra.mxu0 %v216
        %368 = vmatmul.f32.gmra.mxu0 %v341
        %v369 = vpop.f32.mrf.mxu0
        %v370 = vadd.f32 0.0, %v369
        %371 = vmatmul.f32.gmra.mxu0 %v344
        %v372 = vpop.f32.mrf.mxu0
        %v373 = vadd.f32 0.0, %v372
        %374 = vmatmul.f32.gmra.mxu0 %v347
        %v375 = vpop.f32.mrf.mxu0
        %v376 = vadd.f32 0.0, %v375
        %377 = vmatmul.f32.gmra.mxu0 %v350
        %v378 = vpop.f32.mrf.mxu0
        %v379 = vadd.f32 0.0, %v378
        %380 = vdwg.mxu0
        %s381 = scalar_lea.vmem %s209, 32 [#allocation5]
        %382 = vst.msk [vmem:[%s381] sm:$0xff] %vm303, %v370
        %383 = vst.msk [vmem:[%s381 + $0x8] sm:$0xff] %vm303, %v373
        %384 = vst.msk [vmem:[%s381 + $0x10] sm:$0xff] %vm303, %v376
        %385 = vst.msk [vmem:[%s381 + $0x18] sm:$0xff] %vm303, %v379
        %s386 = scalar_lea.vmem %s186, 32 [#allocation2]
        %v387 = vld [vmem:[%s386] sm:$0xff]
        %v388 = vld [vmem:[%s386 + $0x8] sm:$0xff]
        %389 = vmatpush.msra.mxu0 0.0
        %390 = vmatpush.msra.mxu0 0.0
        %391 = vmatpush.msra.mxu0 0.0
        %392 = vmatpush.msra.mxu0 0.0
        %393 = vmatpush.msra.mxu0 0.0
        %394 = vmatpush.msra.mxu0 0.0
        %395 = vmatpush.msra.mxu0 0.0
        %396 = vmatpush.msra.mxu0 0.0
        %397 = vmatpush.msra.mxu0 0.0
        %398 = vmatpush.msra.mxu0 0.0
        %399 = vmatpush.msra.mxu0 0.0
        %400 = vmatpush.msra.mxu0 0.0
        %401 = vmatpush.msra.mxu0 0.0
        %402 = vmatpush.msra.mxu0 0.0
        %403 = vmatpush.msra.mxu0 %v388
        %404 = vmatpush.msra.mxu0 %v387
        %405 = vmatmul.f32.gmra.mxu0 %v222
        %v406 = vpop.f32.mrf.mxu0
        %v407 = vadd.f32 0.0, %v406
        %408 = vmatmul.f32.gmra.mxu0 %v225
        %v409 = vpop.f32.mrf.mxu0
        %v410 = vadd.f32 0.0, %v409
        %411 = vmatmul.f32.gmra.mxu0 %v228
        %v412 = vpop.f32.mrf.mxu0
        %v413 = vadd.f32 0.0, %v412
        %414 = vmatmul.f32.gmra.mxu0 %v231
        %v415 = vpop.f32.mrf.mxu0
        %v416 = vadd.f32 0.0, %v415
        %417 = vdwg.mxu0
        %v419 = vsel %vm220, %v407, 0
        %v422 = vsel %vm220, %v410, 0
        %v425 = vsel %vm220, %v413, 0
        %v428 = vsel %vm220, %v416, 0
        %430 = vmatpush.msra.mxu0 0.0
        %431 = vmatpush.msra.mxu0 0.0
        %432 = vmatpush.msra.mxu0 0.0
        %433 = vmatpush.msra.mxu0 0.0
        %434 = vmatpush.msra.mxu0 0.0
        %435 = vmatpush.msra.mxu0 0.0
        %436 = vmatpush.msra.mxu0 0.0
        %437 = vmatpush.msra.mxu0 0.0
        %438 = vmatpush.msra.mxu0 0.0
        %439 = vmatpush.msra.mxu0 0.0
        %440 = vmatpush.msra.mxu0 0.0
        %441 = vmatpush.msra.mxu0 0.0
        %442 = vmatpush.msra.mxu0 0.0
        %443 = vmatpush.msra.mxu0 0.0
        %444 = vmatpush.msra.mxu0 %v217
        %445 = vmatpush.msra.mxu0 %v216
        %446 = vmatmul.f32.gmra.mxu0 %v419
        %v447 = vpop.f32.mrf.mxu0
        %v448 = vadd.f32 0.0, %v447
        %449 = vmatmul.f32.gmra.mxu0 %v422
        %v450 = vpop.f32.mrf.mxu0
        %v451 = vadd.f32 0.0, %v450
        %452 = vmatmul.f32.gmra.mxu0 %v425
        %v453 = vpop.f32.mrf.mxu0
        %v454 = vadd.f32 0.0, %v453
        %455 = vmatmul.f32.gmra.mxu0 %v428
        %v456 = vpop.f32.mrf.mxu0
        %v457 = vadd.f32 0.0, %v456
        %458 = vdwg.mxu0
        %s459 = scalar_lea.vmem %s209, 64 [#allocation5]
        %460 = vst.msk [vmem:[%s459] sm:$0xff] %vm303, %v448
        %461 = vst.msk [vmem:[%s459 + $0x8] sm:$0xff] %vm303, %v451
        %462 = vst.msk [vmem:[%s459 + $0x10] sm:$0xff] %vm303, %v454
        %463 = vst.msk [vmem:[%s459 + $0x18] sm:$0xff] %vm303, %v457
        %s464 = scalar_lea.vmem %s186, 48 [#allocation2]
        %v465 = vld [vmem:[%s464] sm:$0xff]
        %v466 = vld [vmem:[%s464 + $0x8] sm:$0xff]
        %467 = vmatpush.msra.mxu0 0.0
        %468 = vmatpush.msra.mxu0 0.0
        %469 = vmatpush.msra.mxu0 0.0
        %470 = vmatpush.msra.mxu0 0.0
        %471 = vmatpush.msra.mxu0 0.0
        %472 = vmatpush.msra.mxu0 0.0
        %473 = vmatpush.msra.mxu0 0.0
        %474 = vmatpush.msra.mxu0 0.0
        %475 = vmatpush.msra.mxu0 0.0
        %476 = vmatpush.msra.mxu0 0.0
        %477 = vmatpush.msra.mxu0 0.0
        %478 = vmatpush.msra.mxu0 0.0
        %479 = vmatpush.msra.mxu0 0.0
        %480 = vmatpush.msra.mxu0 0.0
        %481 = vmatpush.msra.mxu0 %v466
        %482 = vmatpush.msra.mxu0 %v465
        %483 = vmatmul.f32.gmra.mxu0 %v222
        %v484 = vpop.f32.mrf.mxu0
        %v485 = vadd.f32 0.0, %v484
        %486 = vmatmul.f32.gmra.mxu0 %v225
        %v487 = vpop.f32.mrf.mxu0
        %v488 = vadd.f32 0.0, %v487
        %489 = vmatmul.f32.gmra.mxu0 %v228
        %v490 = vpop.f32.mrf.mxu0
        %v491 = vadd.f32 0.0, %v490
        %492 = vmatmul.f32.gmra.mxu0 %v231
        %v493 = vpop.f32.mrf.mxu0
        %v494 = vadd.f32 0.0, %v493
        %495 = vdwg.mxu0
        %v497 = vsel %vm220, %v485, 0
        %v500 = vsel %vm220, %v488, 0
        %v503 = vsel %vm220, %v491, 0
        %v506 = vsel %vm220, %v494, 0
        %508 = vmatpush.msra.mxu0 0.0
        %509 = vmatpush.msra.mxu0 0.0
        %510 = vmatpush.msra.mxu0 0.0
        %511 = vmatpush.msra.mxu0 0.0
        %512 = vmatpush.msra.mxu0 0.0
        %513 = vmatpush.msra.mxu0 0.0
        %514 = vmatpush.msra.mxu0 0.0
        %515 = vmatpush.msra.mxu0 0.0
        %516 = vmatpush.msra.mxu0 0.0
        %517 = vmatpush.msra.mxu0 0.0
        %518 = vmatpush.msra.mxu0 0.0
        %519 = vmatpush.msra.mxu0 0.0
        %520 = vmatpush.msra.mxu0 0.0
        %521 = vmatpush.msra.mxu0 0.0
        %522 = vmatpush.msra.mxu0 %v217
        %523 = vmatpush.msra.mxu0 %v216
        %524 = vmatmul.f32.gmra.mxu0 %v497
        %v525 = vpop.f32.mrf.mxu0
        %v526 = vadd.f32 0.0, %v525
        %527 = vmatmul.f32.gmra.mxu0 %v500
        %v528 = vpop.f32.mrf.mxu0
        %v529 = vadd.f32 0.0, %v528
        %530 = vmatmul.f32.gmra.mxu0 %v503
        %v531 = vpop.f32.mrf.mxu0
        %v532 = vadd.f32 0.0, %v531
        %533 = vmatmul.f32.gmra.mxu0 %v506
        %v534 = vpop.f32.mrf.mxu0
        %v535 = vadd.f32 0.0, %v534
        %536 = vdwg.mxu0
        %s537 = scalar_lea.vmem %s209, 96 [#allocation5]
        %538 = vst.msk [vmem:[%s537] sm:$0xff] %vm303, %v526
        %539 = vst.msk [vmem:[%s537 + $0x8] sm:$0xff] %vm303, %v529
        %540 = vst.msk [vmem:[%s537 + $0x10] sm:$0xff] %vm303, %v532
        %541 = vst.msk [vmem:[%s537 + $0x18] sm:$0xff] %vm303, %v535
        %s542 = sand.u32 %s112, 1
        %s543 = scalar_lea.sflag [#allocation4], %s542
        %s544 = sand.u32 %s112, 1
        %s545 = smul.addr %s544, 128
        %s546 = scalar_lea.vmem [#allocation5], %s545
        // Predicated region
        $region37: #{tpu_custom_call.1} parent=31 // pred_check
          %p547 = pneg %p122
        $region38: #{tpu_custom_call.1} parent=31 // pred_check_branch
          %549 = sbr.rel (%p547) target = $region40
        $region39: #{tpu_custom_call.1} parent=31 // pred_region
          %s550 = smul.u32 4, %s25
          %552 = vsyncadd %s543, 0
          %s553 = smul.addr %s550, 4
          %s554 = smul.addr %s24, 16
          %s555 = sadd.s32 %s553, %s554
          %s556 = smul.addr %s555, 8
          %s557 = scalar_lea.hbm %s3, %s556
          %s558 = sshll.u32 %s546, 4
          %s559 = int_to_ptr.vmem [resolvable:$true] %s558
          %s560 = sshll.u32 %s557, 4
          %s561 = int_to_ptr.hbm [resolvable:$true] %s560
          %566 = dma.vmem_to_hbm [thread:$0]  %s559, 2048, %s561, %s543, 128, 128, 8
        $region40: #{tpu_custom_call.1} parent=31 // pred_fallthru
          _
      $region32: #{tpu_custom_call.1} parent=5 // pred_fallthru
        _
      %p567 = scmp.le.s32.totalorder 2, %s15
      // Predicated region
      $region41: #{tpu_custom_call.1} parent=5 // pred_check
        %p568 = pneg %p567
      $region42: #{tpu_custom_call.1} parent=5 // pred_check_branch
        %570 = sbr.rel (%p568) target = $region44
      $region43: #{tpu_custom_call.1} parent=5 // pred_region
        %s571 = ssub.s32 %s15, 2
        // Predicated region
        $region45: #{tpu_custom_call.1} parent=43 // pred_check
          %p572 = pneg %p128
        $region46: #{tpu_custom_call.1} parent=43 // pred_check_branch
          %574 = sbr.rel (%p572) target = $region48
        $region47: #{tpu_custom_call.1} parent=43 // pred_region
          %s575 = sand.u32 %s113, 1
          %s576 = scalar_lea.sflag [#allocation4], %s575
          %s577 = sand.u32 %s113, 1
          %s578 = smul.addr %s577, 128
          %s579 = scalar_lea.vmem [#allocation5], %s578
          %581 = dma.done %s576, 2048
        $region48: #{tpu_custom_call.1} parent=43 // pred_fallthru
          _
      $region44: #{tpu_custom_call.1} parent=5 // pred_fallthru
        _
    $region6: #{tpu_custom_call.1} parent=1 // loop_footer
      %s19 = sadd.s32 1, %s15
    $region7: #{tpu_custom_call.1} parent=1 // loop_footer_branch
      %14 = sbr.rel target = $region3
    $region8: #{tpu_custom_call.1} parent=1 // loop_exit
      _
    %582 = vsyncpa [#allocation3], 1
    %s583 = scalar_lea.sflag [#allocation3], 1
    %584 = vsyncpa %s583, 1
    %585 = vsyncpa [#allocation4], 1
    %s586 = scalar_lea.sflag [#allocation4], 1
    %587 = vsyncpa %s586, 1

</llo_original>
